<compile_context>
chip_gen: v7x
topology: tpu7x:2x2x1
jax: 0.10.0
libtpu: 0.0.40
codegen_flags: <defaults>
</compile_context>

<pallas_src>
import jax
import jax.numpy as jnp
from jax.experimental import pallas as pl
from jax.experimental.pallas import tpu as pltpu

# Lane-axis tile: multiple of 128, sized far below v7x's 32 MiB scoped VMEM
# (per step: x tile ~64 KiB, h ~512 KiB, out tile ~64 KiB, double-buffered).
TILE_B = 2048


def _round_up(x, m):
    return ((x + m - 1) // m) * m


def _q_network_kernel(x_ref, w1_ref, b1_ref, w2_ref, b2_ref, q_ref):
    # x_ref : (4, TILE_B)  concat(state, action), transposed — batch on lanes
    # w1_ref: (64, 4), b1_ref: (64, 1), w2_ref: (1, 64)  — VMEM-resident
    # b2_ref: (1, 1) scalar in SMEM
    x = x_ref[...]

    # Linear(4 -> 64) + ReLU, computed transposed: (64,4) @ (4,B) -> (64,B)
    h = jnp.dot(w1_ref[...], x, preferred_element_type=jnp.float32) + b1_ref[...]
    h = jnp.maximum(h, 0.0)

    # Linear(64 -> 1): (1,64) @ (64,B) -> (1,B), lane-dense output tile
    q = jnp.dot(w2_ref[...], h, preferred_element_type=jnp.float32) + b2_ref[0, 0]
    q_ref[...] = q.astype(q_ref.dtype)


@jax.jit
def q_network(state, action, params):
    """Forward pass of Q_network. state: (B, 3), action: (B, 1) -> (B, 1)."""
    w1, b1, w2, b2 = params  # (64,4), (64,1), (1,64), (1,1)
    B = state.shape[0]

    # Layout plumbing (pure XLA, outside the kernel): concat + transpose so the
    # batch lies on the lane axis, padded to a full lane-tile multiple.
    x_t = jnp.concatenate([state, action], axis=1).T.astype(jnp.float32)  # (4, B)
    tile_b = min(TILE_B, _round_up(B, 128))
    b_pad = _round_up(B, tile_b)
    if b_pad != B:
        x_t = jnp.pad(x_t, ((0, 0), (0, b_pad - B)))

    q_t = pl.pallas_call(
        _q_network_kernel,
        out_shape=jax.ShapeDtypeStruct((1, b_pad), jnp.float32),
        grid=(b_pad // tile_b,),
        in_specs=[
            pl.BlockSpec((4, tile_b), lambda i: (0, i)),         # x tile (streamed)
            pl.BlockSpec((64, 4), lambda i: (0, 0)),             # W1 (resident)
            pl.BlockSpec((64, 1), lambda i: (0, 0)),             # b1 (resident)
            pl.BlockSpec((1, 64), lambda i: (0, 0)),             # W2 (resident)
            pl.BlockSpec(memory_space=pltpu.MemorySpace.SMEM),   # b2 scalar
        ],
        out_specs=pl.BlockSpec((1, tile_b), lambda i: (0, i)),
        compiler_params=pltpu.CompilerParams(
            dimension_semantics=("parallel",)),
    )(x_t, w1, b1, w2, b2)

    return q_t[:, :B].T  # back to PyTorch layout: (B, 1)


def init_params(key):
    """PyTorch-default-style uniform init, stored in kernel-friendly shapes.

    nn.Linear(in, out).weight is (out, in); the transposed-batch layout lets
    the kernel use that (out, in) orientation directly (h^T = W @ x^T).
    """
    k1, k2, k3, k4 = jax.random.split(key, 4)
    lim1 = 1.0 / (4 ** 0.5)
    lim2 = 1.0 / (64 ** 0.5)
    w1 = jax.random.uniform(k1, (64, 4), jnp.float32, -lim1, lim1)
    b1 = jax.random.uniform(k2, (64, 1), jnp.float32, -lim1, lim1)
    w2 = jax.random.uniform(k3, (1, 64), jnp.float32, -lim2, lim2)
    b2 = jax.random.uniform(k4, (1, 1), jnp.float32, -lim2, lim2)
    return (w1, b1, w2, b2)


if __name__ == "__main__":
    key = jax.random.PRNGKey(0)
    pkey, skey, akey = jax.random.split(key, 3)
    params = init_params(pkey)

    B = 8
    state = jax.random.normal(skey, (B, 3), dtype=jnp.float32)
    action = jax.random.normal(akey, (B, 1), dtype=jnp.float32)

    q = q_network(state, action, params)
    jax.block_until_ready(q)

    # Plain-JAX reference (PyTorch Linear semantics: y = x @ W.T + b).
    w1, b1, w2, b2 = params
    x = jnp.concatenate([state, action], axis=1)
    h_ref = jnp.maximum(x @ w1.T + b1.T, 0.0)
    q_ref = h_ref @ w2.T + b2

    assert q.shape == (B, 1)
    assert jnp.allclose(q, q_ref, atol=1e-5), "q mismatch"

    print("KERNEL_OK")
</pallas_src>

<mosaic_0001>
module attributes {stable_mosaic.version = 11 : i64} {
  func.func @_q_network_kernel(%arg0: i32, %arg1: memref<4x128xf32, #tpu.memory_space<vmem>>, %arg2: memref<64x4xf32, #tpu.memory_space<vmem>>, %arg3: memref<64x1xf32, #tpu.memory_space<vmem>>, %arg4: memref<1x64xf32, #tpu.memory_space<vmem>>, %arg5: memref<1x1xf32, #tpu.memory_space<smem>>, %arg6: memref<1x128xf32, #tpu.memory_space<vmem>>) attributes {dimension_semantics = [#tpu.dimension_semantics<parallel>], iteration_bounds = array<i64: 1>, scalar_prefetch = 0 : i64, scratch_operands = 0 : i64, tpu.core_type = #tpu.core_type<tc>, window_params = [{transform_indices = @transform_0, window_bounds = array<i64: 4, 128>}, {pipeline_mode = #tpu.pipeline_mode<synchronous>, transform_indices = @transform_1, window_bounds = array<i64: 64, 4>}, {pipeline_mode = #tpu.pipeline_mode<synchronous>, transform_indices = @transform_2, window_bounds = array<i64: 64, 1>}, {pipeline_mode = #tpu.pipeline_mode<synchronous>, transform_indices = @transform_3, window_bounds = array<i64: 1, 64>}, {transform_indices = @transform_4, window_bounds = array<i64: 1, 1>}, {transform_indices = @transform_5, window_bounds = array<i64: 1, 128>}]} {
    %c0 = arith.constant 0 : index
    %c0_0 = arith.constant 0 : index
    %0 = vector.load %arg1[%c0, %c0_0] : memref<4x128xf32, #tpu.memory_space<vmem>>, vector<4x128xf32>
    %c0_1 = arith.constant 0 : index
    %c0_2 = arith.constant 0 : index
    %1 = vector.load %arg2[%c0_1, %c0_2] : memref<64x4xf32, #tpu.memory_space<vmem>>, vector<64x4xf32>
    %cst = arith.constant dense<0.000000e+00> : vector<64x128xf32>
    %2 = tpu.matmul %1, %0, %cst {dimension_numbers = #tpu.dot_dimension_numbers<[1], [0], [0], [1], [0, 0, 1, 1], [], []>} : vector<64x4xf32>, vector<4x128xf32>, vector<64x128xf32> -> vector<64x128xf32>
    %c0_3 = arith.constant 0 : index
    %c0_4 = arith.constant 0 : index
    %3 = vector.load %arg3[%c0_3, %c0_4] : memref<64x1xf32, #tpu.memory_space<vmem>>, vector<64x1xf32>
    %4 = vector.broadcast %3 : vector<64x1xf32> to vector<64x128xf32>
    %5 = arith.addf %2, %4 : vector<64x128xf32>
    %cst_5 = arith.constant 0.000000e+00 : f32
    %6 = vector.broadcast %cst_5 : f32 to vector<64x128xf32>
    %7 = arith.maximumf %5, %6 : vector<64x128xf32>
    %c0_6 = arith.constant 0 : index
    %c0_7 = arith.constant 0 : index
    %8 = vector.load %arg4[%c0_6, %c0_7] : memref<1x64xf32, #tpu.memory_space<vmem>>, vector<1x64xf32>
    %cst_8 = arith.constant dense<0.000000e+00> : vector<1x128xf32>
    %9 = tpu.matmul %8, %7, %cst_8 {dimension_numbers = #tpu.dot_dimension_numbers<[1], [0], [0], [1], [0, 0, 1, 1], [], []>} : vector<1x64xf32>, vector<64x128xf32>, vector<1x128xf32> -> vector<1x128xf32>
    %c0_9 = arith.constant 0 : index
    %c0_10 = arith.constant 0 : index
    %10 = memref.load %arg5[%c0_9, %c0_10] : memref<1x1xf32, #tpu.memory_space<smem>>
    %11 = vector.broadcast %10 : f32 to vector<1x128xf32>
    %12 = arith.addf %9, %11 : vector<1x128xf32>
    %c0_11 = arith.constant 0 : index
    %c0_12 = arith.constant 0 : index
    %13 = vector.load %arg6[%c0_11, %c0_12] : memref<1x128xf32, #tpu.memory_space<vmem>>, vector<1x128xf32>
    tpu.vector_store %arg6[%c0_11, %c0_12], %12 {strides = array<i32>} : memref<1x128xf32, #tpu.memory_space<vmem>>, vector<1x128xf32>,
    return
  }
  func.func @transform_0(%arg0: i32) -> (i32, i32) {
    %c0_i32 = arith.constant 0 : i32
    %c0_i32_0 = arith.constant 0 : i32
    return %c0_i32, %arg0 : i32, i32
  }
  func.func @transform_1(%arg0: i32) -> (i32, i32) {
    %c0_i32 = arith.constant 0 : i32
    %c0_i32_0 = arith.constant 0 : i32
    %c0_i32_1 = arith.constant 0 : i32
    return %c0_i32, %c0_i32_0 : i32, i32
  }
  func.func @transform_2(%arg0: i32) -> (i32, i32) {
    %c0_i32 = arith.constant 0 : i32
    %c0_i32_0 = arith.constant 0 : i32
    %c0_i32_1 = arith.constant 0 : i32
    return %c0_i32, %c0_i32_0 : i32, i32
  }
  func.func @transform_3(%arg0: i32) -> (i32, i32) {
    %c0_i32 = arith.constant 0 : i32
    %c0_i32_0 = arith.constant 0 : i32
    %c0_i32_1 = arith.constant 0 : i32
    return %c0_i32, %c0_i32_0 : i32, i32
  }
  func.func @transform_4(%arg0: i32) -> (i32, i32) {
    %c0_i32 = arith.constant 0 : i32
    %c0_i32_0 = arith.constant 0 : i32
    %c0_i32_1 = arith.constant 0 : i32
    return %c0_i32, %c0_i32_0 : i32, i32
  }
  func.func @transform_5(%arg0: i32) -> (i32, i32) {
    %c0_i32 = arith.constant 0 : i32
    %c0_i32_0 = arith.constant 0 : i32
    return %c0_i32, %arg0 : i32, i32
  }
}

</mosaic_0001>

<llo_original>
// kernel: q_network.1
$region0: #{q_network.1}
  #allocation0 [shape = 'u32[]', space=smem, size = 0x4, offset = 0x4, fixed_abs, tag = 'smem constant byte address 0x4 - core index']
  #allocation1 [shape = 'u32[144,128]{1,0:T(1,128)}', space=vmem, size = 0x12000, scoped, tag = 'internal scratch']
  #allocation2 [shape = 'f32[1,1]{1,0:T(1,128)S(6)}', space=smem, size = 0x200, scoped, tag = 'scoped memory for q_network.1']
  %s0 = inlined_call_operand.vmem [shape: f32[4,128], index: 0, kind: input, shape index: {}]
  %s1 = inlined_call_operand.vmem [shape: f32[64,4], index: 1, kind: input, shape index: {}]
  %s2 = inlined_call_operand.vmem [shape: f32[64,1], index: 2, kind: input, shape index: {}]
  %s3 = inlined_call_operand.vmem [shape: f32[1,64], index: 3, kind: input, shape index: {}]
  %s4 = inlined_call_operand.<no memory space> [shape: f32[1,1], index: 4, kind: input, shape index: {}]
  %s5 = inlined_call_operand.vmem [shape: f32[1,128], index: 5, kind: output, shape index: {}]
  %s6 = sld [smem:[#allocation0]]
  $region30: #{q_network.1} parent=0
    _
  %s8 = ssub.s32 1, %s6
  %s9 = scalar_select 0, %s8, %s6
  %10 = sst [smem:[#allocation2]] %s4
  // Predicated region
  $region2: #{q_network.1} parent=0 // pred_check
    _
  $region3: #{q_network.1} parent=0 // pred_check_branch
    %12 = sbr.rel (0) target = $region5
  $region4: #{q_network.1} parent=0 // pred_region
    _
  $region5: #{q_network.1} parent=0 // pred_fallthru
    _
  // Predicated region
  $region6: #{q_network.1} parent=0 // pred_check
    _
  $region7: #{q_network.1} parent=0 // pred_check_branch
    %14 = sbr.rel (0) target = $region9
  $region8: #{q_network.1} parent=0 // pred_region
    _
  $region9: #{q_network.1} parent=0 // pred_fallthru
    _
  // Predicated region
  $region10: #{q_network.1} parent=0 // pred_check
    _
  $region11: #{q_network.1} parent=0 // pred_check_branch
    %16 = sbr.rel (0) target = $region13
  $region12: #{q_network.1} parent=0 // pred_region
    _
  $region13: #{q_network.1} parent=0 // pred_fallthru
    _
  // Predicated region
  $region14: #{q_network.1} parent=0 // pred_check
    _
  $region15: #{q_network.1} parent=0 // pred_check_branch
    %18 = sbr.rel (0) target = $region17
  $region16: #{q_network.1} parent=0 // pred_region
    _
  $region17: #{q_network.1} parent=0 // pred_fallthru
    _
  // Predicated region
  $region18: #{q_network.1} parent=0 // pred_check
    _
  $region19: #{q_network.1} parent=0 // pred_check_branch
    %20 = sbr.rel (0) target = $region21
  $region20: #{q_network.1} parent=0 // pred_region
    _
  $region21: #{q_network.1} parent=0 // pred_fallthru
    _
  %v21 = vld [vmem:[%s0] sm:$0xf]
  %v22 = vld [vmem:[%s1] sm:$0xff]
  %v23 = vld [vmem:[%s1 + $0x8] sm:$0xff]
  %v24 = vld [vmem:[%s1 + $0x10] sm:$0xff]
  %v25 = vld [vmem:[%s1 + $0x18] sm:$0xff]
  %v26 = vld [vmem:[%s1 + $0x20] sm:$0xff]
  %v27 = vld [vmem:[%s1 + $0x28] sm:$0xff]
  %v28 = vld [vmem:[%s1 + $0x30] sm:$0xff]
  %v29 = vld [vmem:[%s1 + $0x38] sm:$0xff]
  %v30 = vld [vmem:[%s2] sm:$0xff]
  %v31 = vld [vmem:[%s2 + $0x8] sm:$0xff]
  %v32 = vld [vmem:[%s2 + $0x10] sm:$0xff]
  %v33 = vld [vmem:[%s2 + $0x18] sm:$0xff]
  %v34 = vld [vmem:[%s2 + $0x20] sm:$0xff]
  %v35 = vld [vmem:[%s2 + $0x28] sm:$0xff]
  %v36 = vld [vmem:[%s2 + $0x30] sm:$0xff]
  %v37 = vld [vmem:[%s2 + $0x38] sm:$0xff]
  %39 = vset.pattern.permute.xlu0 0
  %40 = vperm.xlu0 %39, %v30
  %v41 = vpop.permute.xlu0 %40
  %44 = vset.pattern.permute.xlu0 0
  %45 = vperm.xlu0 %44, %v31
  %v46 = vpop.permute.xlu0 %45
  %49 = vset.pattern.permute.xlu0 0
  %50 = vperm.xlu0 %49, %v32
  %v51 = vpop.permute.xlu0 %50
  %54 = vset.pattern.permute.xlu0 0
  %55 = vperm.xlu0 %54, %v33
  %v56 = vpop.permute.xlu0 %55
  %59 = vset.pattern.permute.xlu0 0
  %60 = vperm.xlu0 %59, %v34
  %v61 = vpop.permute.xlu0 %60
  %64 = vset.pattern.permute.xlu0 0
  %65 = vperm.xlu0 %64, %v35
  %v66 = vpop.permute.xlu0 %65
  %69 = vset.pattern.permute.xlu0 0
  %70 = vperm.xlu0 %69, %v36
  %v71 = vpop.permute.xlu0 %70
  %74 = vset.pattern.permute.xlu0 0
  %75 = vperm.xlu0 %74, %v37
  %v76 = vpop.permute.xlu0 %75
  %vm78 = vcmask 31744
  %v80 = vsel %vm78, %v22, 0
  %v83 = vsel %vm78, %v23, 0
  %v86 = vsel %vm78, %v24, 0
  %v89 = vsel %vm78, %v25, 0
  %v92 = vsel %vm78, %v26, 0
  %v95 = vsel %vm78, %v27, 0
  %v98 = vsel %vm78, %v28, 0
  %v101 = vsel %vm78, %v29, 0
  %vm103 = vcmask 1043456
  %v105 = vsel %vm103, %v21, 0
  %107 = vmatprep.subr.mxu0 0.0
  %108 = vmatpush1.msra.mxu0 %v105
  %109 = vmatprep.subr.mxu0 0.0
  %110 = vmatpush1.msra.mxu0 0.0
  %111 = vmatprep.subr.mxu0 0.0
  %112 = vmatpush1.msra.mxu0 0.0
  %113 = vmatprep.subr.mxu0 0.0
  %114 = vmatpush1.msra.mxu0 0.0
  %115 = vmatprep.subr.mxu0 0.0
  %116 = vmatpush1.msra.mxu0 0.0
  %117 = vmatprep.subr.mxu0 0.0
  %118 = vmatpush1.msra.mxu0 0.0
  %119 = vmatprep.subr.mxu0 0.0
  %120 = vmatpush1.msra.mxu0 0.0
  %121 = vmatprep.subr.mxu0 0.0
  %122 = vmatpush1.msra.mxu0 0.0
  %123 = vmatprep.subr.mxu0 0.0
  %124 = vmatpush1.msra.mxu0 0.0
  %125 = vmatprep.subr.mxu0 0.0
  %126 = vmatpush1.msra.mxu0 0.0
  %127 = vmatprep.subr.mxu0 0.0
  %128 = vmatpush1.msra.mxu0 0.0
  %129 = vmatprep.subr.mxu0 0.0
  %130 = vmatpush1.msra.mxu0 0.0
  %131 = vmatprep.subr.mxu0 0.0
  %132 = vmatpush1.msra.mxu0 0.0
  %133 = vmatprep.subr.mxu0 0.0
  %134 = vmatpush1.msra.mxu0 0.0
  %135 = vmatprep.subr.mxu0 0.0
  %136 = vmatpush1.msra.mxu0 0.0
  %137 = vmatprep.subr.mxu0 0.0
  %138 = vmatpush1.msra.mxu0 0.0
  %139 = vmatprep.subr.mxu0 0.0
  %140 = vmatpush1.msra.mxu0 0.0
  %141 = vmatprep.subr.mxu0 0.0
  %142 = vmatpush1.msra.mxu0 0.0
  %143 = vmatprep.subr.mxu0 0.0
  %144 = vmatpush1.msra.mxu0 0.0
  %145 = vmatprep.subr.mxu0 0.0
  %146 = vmatpush1.msra.mxu0 0.0
  %147 = vmatprep.subr.mxu0 0.0
  %148 = vmatpush1.msra.mxu0 0.0
  %149 = vmatprep.subr.mxu0 0.0
  %150 = vmatpush1.msra.mxu0 0.0
  %151 = vmatprep.subr.mxu0 0.0
  %152 = vmatpush1.msra.mxu0 0.0
  %153 = vmatprep.subr.mxu0 0.0
  %154 = vmatpush1.msra.mxu0 0.0
  %155 = vmatprep.subr.mxu0 0.0
  %156 = vmatpush1.msra.mxu0 0.0
  %157 = vmatprep.subr.mxu0 0.0
  %158 = vmatpush1.msra.mxu0 0.0
  %159 = vmatprep.subr.mxu0 0.0
  %160 = vmatpush1.msra.mxu0 0.0
  %161 = vmatprep.subr.mxu0 0.0
  %162 = vmatpush1.msra.mxu0 0.0
  %163 = vmatprep.subr.mxu0 0.0
  %164 = vmatpush1.msra.mxu0 0.0
  %165 = vmatprep.subr.mxu0 0.0
  %166 = vmatpush1.msra.mxu0 0.0
  %167 = vmatprep.subr.mxu0 0.0
  %168 = vmatpush1.msra.mxu0 0.0
  %169 = vmatprep.subr.mxu0 0.0
  %170 = vmatpush1.msra.mxu0 0.0
  %171 = vmatprep.mubr.f32.mxu0 0.0
  %172 = vmatmul.mubr.f32.gmra.mrb[0].mxu0 %v80
  %v173 = vpop.f32.mrb[0].mxu0
  %v174 = vadd.f32 %v41, %v173
  %v175 = vpop.f32.mrb[0].mxu0
  %176 = vmatprep.mubr.f32.mxu0 0.0
  %177 = vmatmul.mubr.f32.gmra.mrb[0].mxu0 %v83
  %v178 = vpop.f32.mrb[0].mxu0
  %v179 = vadd.f32 %v46, %v178
  %v180 = vpop.f32.mrb[0].mxu0
  %181 = vmatprep.mubr.f32.mxu0 0.0
  %182 = vmatmul.mubr.f32.gmra.mrb[0].mxu0 %v86
  %v183 = vpop.f32.mrb[0].mxu0
  %v184 = vadd.f32 %v51, %v183
  %v185 = vpop.f32.mrb[0].mxu0
  %186 = vmatprep.mubr.f32.mxu0 0.0
  %187 = vmatmul.mubr.f32.gmra.mrb[0].mxu0 %v89
  %v188 = vpop.f32.mrb[0].mxu0
  %v189 = vadd.f32 %v56, %v188
  %v190 = vpop.f32.mrb[0].mxu0
  %191 = vmatprep.mubr.f32.mxu0 0.0
  %192 = vmatmul.mubr.f32.gmra.mrb[0].mxu0 %v92
  %v193 = vpop.f32.mrb[0].mxu0
  %v194 = vadd.f32 %v61, %v193
  %v195 = vpop.f32.mrb[0].mxu0
  %196 = vmatprep.mubr.f32.mxu0 0.0
  %197 = vmatmul.mubr.f32.gmra.mrb[0].mxu0 %v95
  %v198 = vpop.f32.mrb[0].mxu0
  %v199 = vadd.f32 %v66, %v198
  %v200 = vpop.f32.mrb[0].mxu0
  %201 = vmatprep.mubr.f32.mxu0 0.0
  %202 = vmatmul.mubr.f32.gmra.mrb[0].mxu0 %v98
  %v203 = vpop.f32.mrb[0].mxu0
  %v204 = vadd.f32 %v71, %v203
  %v205 = vpop.f32.mrb[0].mxu0
  %206 = vmatprep.mubr.f32.mxu0 0.0
  %207 = vmatmul.mubr.f32.gmra.mrb[0].mxu0 %v101
  %v208 = vpop.f32.mrb[0].mxu0
  %v209 = vadd.f32 %v76, %v208
  %v210 = vpop.f32.mrb[0].mxu0
  %211 = vdwg.mxu0
  %v212 = vmax.f32 %v174, 0.0
  %v213 = vmax.f32 %v179, 0.0
  %v214 = vmax.f32 %v184, 0.0
  %v215 = vmax.f32 %v189, 0.0
  %v216 = vmax.f32 %v194, 0.0
  %v217 = vmax.f32 %v199, 0.0
  %v218 = vmax.f32 %v204, 0.0
  %v219 = vmax.f32 %v209, 0.0
  %v220 = vld [vmem:[%s3] sm:$0x1]
  %s221 = sld [smem:[#allocation2]]
  %v222 = vstv %s221
  %vm223 = vcmask 523264
  %v225 = vsel %vm223, %v220, 0
  %227 = vmatprep.subr.mxu0 0.0
  %228 = vmatpush1.msra.mxu0 %v212
  %229 = vmatprep.subr.mxu0 0.0
  %230 = vmatpush1.msra.mxu0 %v213
  %231 = vmatprep.subr.mxu0 0.0
  %232 = vmatpush1.msra.mxu0 %v214
  %233 = vmatprep.subr.mxu0 0.0
  %234 = vmatpush1.msra.mxu0 %v215
  %235 = vmatprep.subr.mxu0 0.0
  %236 = vmatpush1.msra.mxu0 %v216
  %237 = vmatprep.subr.mxu0 0.0
  %238 = vmatpush1.msra.mxu0 %v217
  %239 = vmatprep.subr.mxu0 0.0
  %240 = vmatpush1.msra.mxu0 %v218
  %241 = vmatprep.subr.mxu0 0.0
  %242 = vmatpush1.msra.mxu0 %v219
  %243 = vmatprep.subr.mxu0 0.0
  %244 = vmatpush1.msra.mxu0 0.0
  %245 = vmatprep.subr.mxu0 0.0
  %246 = vmatpush1.msra.mxu0 0.0
  %247 = vmatprep.subr.mxu0 0.0
  %248 = vmatpush1.msra.mxu0 0.0
  %249 = vmatprep.subr.mxu0 0.0
  %250 = vmatpush1.msra.mxu0 0.0
  %251 = vmatprep.subr.mxu0 0.0
  %252 = vmatpush1.msra.mxu0 0.0
  %253 = vmatprep.subr.mxu0 0.0
  %254 = vmatpush1.msra.mxu0 0.0
  %255 = vmatprep.subr.mxu0 0.0
  %256 = vmatpush1.msra.mxu0 0.0
  %257 = vmatprep.subr.mxu0 0.0
  %258 = vmatpush1.msra.mxu0 0.0
  %259 = vmatprep.subr.mxu0 0.0
  %260 = vmatpush1.msra.mxu0 0.0
  %261 = vmatprep.subr.mxu0 0.0
  %262 = vmatpush1.msra.mxu0 0.0
  %263 = vmatprep.subr.mxu0 0.0
  %264 = vmatpush1.msra.mxu0 0.0
  %265 = vmatprep.subr.mxu0 0.0
  %266 = vmatpush1.msra.mxu0 0.0
  %267 = vmatprep.subr.mxu0 0.0
  %268 = vmatpush1.msra.mxu0 0.0
  %269 = vmatprep.subr.mxu0 0.0
  %270 = vmatpush1.msra.mxu0 0.0
  %271 = vmatprep.subr.mxu0 0.0
  %272 = vmatpush1.msra.mxu0 0.0
  %273 = vmatprep.subr.mxu0 0.0
  %274 = vmatpush1.msra.mxu0 0.0
  %275 = vmatprep.subr.mxu0 0.0
  %276 = vmatpush1.msra.mxu0 0.0
  %277 = vmatprep.subr.mxu0 0.0
  %278 = vmatpush1.msra.mxu0 0.0
  %279 = vmatprep.subr.mxu0 0.0
  %280 = vmatpush1.msra.mxu0 0.0
  %281 = vmatprep.subr.mxu0 0.0
  %282 = vmatpush1.msra.mxu0 0.0
  %283 = vmatprep.subr.mxu0 0.0
  %284 = vmatpush1.msra.mxu0 0.0
  %285 = vmatprep.subr.mxu0 0.0
  %286 = vmatpush1.msra.mxu0 0.0
  %287 = vmatprep.subr.mxu0 0.0
  %288 = vmatpush1.msra.mxu0 0.0
  %289 = vmatprep.subr.mxu0 0.0
  %290 = vmatpush1.msra.mxu0 0.0
  %291 = vmatprep.mubr.f32.mxu0 0.0
  %292 = vmatmul.mubr.f32.gmra.mrb[0].mxu0 %v225
  %v293 = vpop.f32.mrb[0].mxu0
  %v294 = vadd.f32 %v222, %v293
  %v295 = vpop.f32.mrb[0].mxu0
  %296 = vdwg.mxu0
  %297 = vst [vmem:[%s5] sm:$0x1] %v294
  // Predicated region
  $region22: #{q_network.1} parent=0 // pred_check
    _
  $region23: #{q_network.1} parent=0 // pred_check_branch
    %299 = sbr.rel (0) target = $region25
  $region24: #{q_network.1} parent=0 // pred_region
    _
  $region25: #{q_network.1} parent=0 // pred_fallthru
    _
  // Predicated region
  $region26: #{q_network.1} parent=0 // pred_check
    _
  $region27: #{q_network.1} parent=0 // pred_check_branch
    %301 = sbr.rel (0) target = $region29
  $region28: #{q_network.1} parent=0 // pred_region
    _
  $region29: #{q_network.1} parent=0 // pred_fallthru
    _

</llo_original>
